<compile_context>
chip_gen: v6e
topology: v6e:2x2x1
jax: 0.10.0
libtpu: 0.0.40
codegen_flags: <defaults>
</compile_context>

<pallas_src>
import jax
import jax.numpy as jnp
from jax.experimental import pallas as pl
from jax.experimental.pallas import tpu as pltpu


_ROW_TILE = 256                       # dst/src row tile (multiple of 8)
_VMEM_LIMIT_BYTES = 32 * 1024 * 1024  # safe on v5e/v6e (128 MiB) and v7x (64 MiB physical)
_NEG_SLOPE = 0.2
_MASK_FILL = -1e30


def _round_up(n, m):
    return ((n + m - 1) // m) * m


def _row_pad(n):
    """Pad a row count and pick a row tile that divides it."""
    if n <= _ROW_TILE:
        p = _round_up(max(n, 8), 8)
        return p, p
    p = _round_up(n, _ROW_TILE)
    return p, _ROW_TILE


# ----------------------------- Pallas kernels --------------------------------

def _make_project_kernel(fout_pad):
    """h_comb = x_bf16 @ w_comb_bf16 ; split into h (bf16) and attention logits (f32)."""
    def kernel(x_ref, w_ref, h_ref, alpha_ref):
        hc = jnp.dot(x_ref[...], w_ref[...],
                     preferred_element_type=jnp.float32)       # [TS, Fout_pad + 128]
        h_ref[...] = hc[:, :fout_pad].astype(jnp.bfloat16)      # projected features
        alpha_ref[...] = hc[:, fout_pad:]                        # per-head att logits
    return kernel


def _make_attend_kernel(heads, c_out, fout_pad, apply_relu):
    """Masked softmax over incoming edges + per-head aggregation, single dense store."""
    def kernel(a_dst_ref, a_src_ref, h_ref, mask_ref, bias_ref, out_ref):
        a_dst = a_dst_ref[...]                                   # [TD, 128] f32
        edge = mask_ref[...] > 0                                 # [TD, Ns]  bool
        h = h_ref[...]                                           # [Ns, Fout_pad] bf16
        n_rows = a_dst.shape[0]

        pieces = []
        for hd in range(heads):                                  # static unroll
            e = a_dst[:, hd:hd + 1] + a_src_ref[hd:hd + 1, :]    # [TD, Ns]
            e = jnp.where(e >= 0, e, _NEG_SLOPE * e)             # leaky_relu
            e = jnp.where(edge, e, jnp.float32(_MASK_FILL))      # mask non-edges
            m = jnp.max(e, axis=1, keepdims=True)
            p = jnp.exp(e - m)                                   # masked entries underflow to 0
            denom = jnp.sum(p, axis=1, keepdims=True)            # >= 1 (self-loops)
            agg = jnp.dot(p.astype(jnp.bfloat16),
                          h[:, hd * c_out:(hd + 1) * c_out],
                          preferred_element_type=jnp.float32)    # [TD, C]
            pieces.append(agg * pl.reciprocal(denom, approx=True))

        pad_cols = fout_pad - heads * c_out
        if pad_cols:
            pieces.append(jnp.zeros((n_rows, pad_cols), jnp.float32))
        out = jnp.concatenate(pieces, axis=1) if len(pieces) > 1 else pieces[0]
        out = out + bias_ref[...]
        if apply_relu:
            out = jnp.maximum(out, 0.0)
        out_ref[...] = out                                       # single lane-dense store
    return kernel


# ------------------------------ layer wrapper ---------------------------------

def gat_conv_pallas(x, mask, p, apply_relu):
    """One GATConv layer. x: [Ns, Fin] f32, mask: [Nd, Ns] f32 (1 = edge, self-loops set)."""
    heads, c_out, fout_pad = p["heads"], p["c_out"], p["fout_pad"]
    n_src, f_in = x.shape
    n_dst = mask.shape[0]
    ns_pad, ts = _row_pad(n_src)
    nd_pad, td = _row_pad(n_dst)
    h_pad = _round_up(max(heads, 8), 8)
    fcomb = fout_pad + 128

    cparams = pltpu.CompilerParams(dimension_semantics=("parallel",),
                                   vmem_limit_bytes=_VMEM_LIMIT_BYTES)

    # --- projection (tiled over src rows) ---
    x_p = jnp.zeros((ns_pad, f_in), jnp.bfloat16).at[:n_src].set(x.astype(jnp.bfloat16))
    h_src, alpha = pl.pallas_call(
        _make_project_kernel(fout_pad),
        grid=(ns_pad // ts,),
        in_specs=[pl.BlockSpec((ts, f_in), lambda i: (i, 0)),
                  pl.BlockSpec((f_in, fcomb), lambda i: (0, 0))],
        out_specs=(pl.BlockSpec((ts, fout_pad), lambda i: (i, 0)),
                   pl.BlockSpec((ts, 128), lambda i: (i, 0))),
        out_shape=(jax.ShapeDtypeStruct((ns_pad, fout_pad), jnp.bfloat16),
                   jax.ShapeDtypeStruct((ns_pad, 128), jnp.float32)),
        compiler_params=cparams,
    )(x_p, p["w_comb"])

    # --- layout plumbing for the attention kernel (wrapper-side, not compute) ---
    a_src_t = jnp.zeros((h_pad, ns_pad), jnp.float32).at[:heads].set(alpha[:, :heads].T)
    a_dst = jnp.zeros((nd_pad, 128), jnp.float32)
    a_dst = a_dst.at[:n_dst, :heads].set(alpha[:n_dst, heads:2 * heads])
    mask_p = jnp.zeros((nd_pad, ns_pad), jnp.bfloat16)
    mask_p = mask_p.at[:n_dst, :n_src].set(mask.astype(jnp.bfloat16))

    # --- attention + aggregation (tiled over dst rows) ---
    out = pl.pallas_call(
        _make_attend_kernel(heads, c_out, fout_pad, apply_relu),
        grid=(nd_pad // td,),
        in_specs=[pl.BlockSpec((td, 128), lambda i: (i, 0)),        # alpha_dst tile
                  pl.BlockSpec((h_pad, ns_pad), lambda i: (0, 0)),  # alpha_src (transposed)
                  pl.BlockSpec((ns_pad, fout_pad), lambda i: (0, 0)),  # h_src (resident)
                  pl.BlockSpec((td, ns_pad), lambda i: (i, 0)),     # mask rows
                  pl.BlockSpec((1, fout_pad), lambda i: (0, 0))],   # bias
        out_specs=pl.BlockSpec((td, fout_pad), lambda i: (i, 0)),
        out_shape=jax.ShapeDtypeStruct((nd_pad, fout_pad), jnp.float32),
        compiler_params=cparams,
    )(a_dst, a_src_t, h_src, mask_p, p["bias_pad"])

    return out[:n_dst, :heads * c_out]


# ------------------------------ params / glue ---------------------------------

def _glorot(key, shape):
    fan_in, fan_out = shape[-2], shape[-1]
    limit = (6.0 / (fan_in + fan_out)) ** 0.5
    return jax.random.uniform(key, shape, jnp.float32, -limit, limit)


def init_gat_conv_params(key, in_ch, out_ch, heads):
    k_w, k_as, k_ad = jax.random.split(key, 3)
    w = _glorot(k_w, (in_ch, heads * out_ch))                   # shared lin, bias=False
    att_src = _glorot(k_as, (heads, out_ch))
    att_dst = _glorot(k_ad, (heads, out_ch))

    fout = heads * out_ch
    fout_pad = _round_up(fout, 128)

    # fold attention vectors into the projection weight (host-side):
    #   alpha_src = <h[:, head], att_src[head]> = x @ (W_head @ att_src[head])
    w_heads = w.reshape(in_ch, heads, out_ch)
    w_att_src = jnp.einsum("ihc,hc->ih", w_heads, att_src)       # [Fin, H]
    w_att_dst = jnp.einsum("ihc,hc->ih", w_heads, att_dst)       # [Fin, H]

    w_comb = jnp.zeros((in_ch, fout_pad + 128), jnp.float32)
    w_comb = w_comb.at[:, :fout].set(w)
    w_comb = w_comb.at[:, fout_pad:fout_pad + heads].set(w_att_src)
    w_comb = w_comb.at[:, fout_pad + heads:fout_pad + 2 * heads].set(w_att_dst)

    bias_pad = jnp.zeros((1, fout_pad), jnp.float32)             # PyG zero-inits bias
    return dict(w_comb=w_comb.astype(jnp.bfloat16), bias_pad=bias_pad,
                heads=heads, c_out=out_ch, fout_pad=fout_pad)


def init_gat_params(key, in_channels, hidden_channels, out_channels, n_heads):
    params = []
    keys = jax.random.split(key, len(hidden_channels) + 1)
    if len(hidden_channels) > 0:
        params.append(init_gat_conv_params(keys[0], in_channels, hidden_channels[0], n_heads))
        for i in range(len(hidden_channels) - 1):
            params.append(init_gat_conv_params(
                keys[i + 1], hidden_channels[i] * n_heads, hidden_channels[i + 1], n_heads))
        params.append(init_gat_conv_params(
            keys[-1], hidden_channels[-1] * n_heads, out_channels, 1))
    else:
        params.append(init_gat_conv_params(keys[0], in_channels, out_channels, 1))
    return params


def edge_index_to_mask(edge_index, n_dst, n_src):
    src, dst = edge_index[0], edge_index[1]
    mask = jnp.zeros((n_dst, n_src), jnp.float32)
    mask = mask.at[dst, src].set(1.0)
    # GATConv add_self_loops: in the sampled bipartite graph, target node j is source node j
    idx = jnp.arange(n_dst)
    mask = mask.at[idx, idx].set(1.0)
    return mask


def gat_forward(x, adjs, params):
    """Mirrors GAT.forward(x, adjs) in eval mode (dropout == identity)."""
    num_layers = len(params)
    for i, (edge_index, size) in enumerate(adjs):
        n_src, n_dst = size
        mask = edge_index_to_mask(edge_index, n_dst, n_src)
        x = gat_conv_pallas(x, mask, params[i],
                            apply_relu=(i != num_layers - 1))
    return x


# ---------------------------------- main --------------------------------------

if __name__ == "__main__":
    key = jax.random.PRNGKey(0)
    k_x, k_p, k_e0, k_e1 = jax.random.split(key, 4)

    in_channels, hidden_channels, out_channels, n_heads, dropout = 16, [32], 8, 2, 0.5
    N0, N1, N2 = 12, 8, 4          # sampled node counts per hop (N0 >= N1 >= N2)
    E0, E1 = 24, 12                # edges per bipartite layer graph

    x = jax.random.normal(k_x, (N0, in_channels), jnp.float32)
    params = init_gat_params(k_p, in_channels, hidden_channels, out_channels, n_heads)

    e0_src = jax.random.randint(jax.random.fold_in(k_e0, 0), (E0,), 0, N0)
    e0_dst = jax.random.randint(jax.random.fold_in(k_e0, 1), (E0,), 0, N1)
    e1_src = jax.random.randint(jax.random.fold_in(k_e1, 0), (E1,), 0, N1)
    e1_dst = jax.random.randint(jax.random.fold_in(k_e1, 1), (E1,), 0, N2)
    adjs = [
        (jnp.stack([e0_src, e0_dst]), (N0, N1)),
        (jnp.stack([e1_src, e1_dst]), (N1, N2)),
    ]

    out = gat_forward(x, adjs, params)
    out = jax.block_until_ready(out)
    assert out.shape == (N2, out_channels), out.shape
    assert bool(jnp.all(jnp.isfinite(out)))
    print("KERNEL_OK")
</pallas_src>

<mosaic_0001>
module attributes {stable_mosaic.version = 11 : i64} {
  func.func @kernel(%arg0: i32, %arg1: memref<16x16xbf16, #tpu.memory_space<vmem>>, %arg2: memref<16x256xbf16, #tpu.memory_space<vmem>>, %arg3: memref<16x128xbf16, #tpu.memory_space<vmem>>, %arg4: memref<16x128xf32, #tpu.memory_space<vmem>>) attributes {dimension_semantics = [#tpu.dimension_semantics<parallel>], iteration_bounds = array<i64: 1>, scalar_prefetch = 0 : i64, scratch_operands = 0 : i64, tpu.core_type = #tpu.core_type<tc>, window_params = [{transform_indices = @transform_0, window_bounds = array<i64: 16, 16>}, {pipeline_mode = #tpu.pipeline_mode<synchronous>, transform_indices = @transform_1, window_bounds = array<i64: 16, 256>}, {transform_indices = @transform_2, window_bounds = array<i64: 16, 128>}, {transform_indices = @transform_3, window_bounds = array<i64: 16, 128>}]} {
    %c0 = arith.constant 0 : index
    %c0_0 = arith.constant 0 : index
    %0 = vector.load %arg1[%c0, %c0_0] : memref<16x16xbf16, #tpu.memory_space<vmem>>, vector<16x16xbf16>
    %c0_1 = arith.constant 0 : index
    %c0_2 = arith.constant 0 : index
    %1 = vector.load %arg2[%c0_1, %c0_2] : memref<16x256xbf16, #tpu.memory_space<vmem>>, vector<16x256xbf16>
    %cst = arith.constant dense<0.000000e+00> : vector<16x256xf32>
    %2 = tpu.matmul %0, %1, %cst {dimension_numbers = #tpu.dot_dimension_numbers<[1], [0], [0], [1], [0, 0, 1, 1], [], []>} : vector<16x16xbf16>, vector<16x256xbf16>, vector<16x256xf32> -> vector<16x256xf32>
    %3 = vector.extract_strided_slice %2 {offsets = [0, 0], sizes = [16, 128], strides = [1, 1]} : vector<16x256xf32> to vector<16x128xf32>
    %4 = arith.truncf %3 : vector<16x128xf32> to vector<16x128xbf16>
    %c0_3 = arith.constant 0 : index
    %c0_4 = arith.constant 0 : index
    %5 = vector.load %arg3[%c0_3, %c0_4] : memref<16x128xbf16, #tpu.memory_space<vmem>>, vector<16x128xbf16>
    tpu.vector_store %arg3[%c0_3, %c0_4], %4 {strides = array<i32>} : memref<16x128xbf16, #tpu.memory_space<vmem>>, vector<16x128xbf16>,
    %6 = vector.extract_strided_slice %2 {offsets = [0, 128], sizes = [16, 128], strides = [1, 1]} : vector<16x256xf32> to vector<16x128xf32>
    %c0_5 = arith.constant 0 : index
    %c0_6 = arith.constant 0 : index
    %7 = vector.load %arg4[%c0_5, %c0_6] : memref<16x128xf32, #tpu.memory_space<vmem>>, vector<16x128xf32>
    tpu.vector_store %arg4[%c0_5, %c0_6], %6 {strides = array<i32>} : memref<16x128xf32, #tpu.memory_space<vmem>>, vector<16x128xf32>,
    return
  }
  func.func @transform_0(%arg0: i32) -> (i32, i32) {
    %c0_i32 = arith.constant 0 : i32
    %c0_i32_0 = arith.constant 0 : i32
    return %arg0, %c0_i32 : i32, i32
  }
  func.func @transform_1(%arg0: i32) -> (i32, i32) {
    %c0_i32 = arith.constant 0 : i32
    %c0_i32_0 = arith.constant 0 : i32
    %c0_i32_1 = arith.constant 0 : i32
    return %c0_i32, %c0_i32_0 : i32, i32
  }
  func.func @transform_2(%arg0: i32) -> (i32, i32) {
    %c0_i32 = arith.constant 0 : i32
    %c0_i32_0 = arith.constant 0 : i32
    return %arg0, %c0_i32 : i32, i32
  }
  func.func @transform_3(%arg0: i32) -> (i32, i32) {
    %c0_i32 = arith.constant 0 : i32
    %c0_i32_0 = arith.constant 0 : i32
    return %arg0, %c0_i32 : i32, i32
  }
}

</mosaic_0001>

<llo_original>
// kernel: tpu_custom_call.1
$region0: #{tpu_custom_call.1}
  #allocation0 [shape = 'u32[]', space=smem, size = 0x4, offset = 0x4, fixed_abs, tag = 'smem constant byte address 0x4 - core index']
  #allocation1 [shape = 'u32[144,128]{1,0:T(1,128)}', space=vmem, size = 0x12000, scoped, tag = 'internal scratch']
  %s0 = inlined_call_operand.hbm [shape: bf16[16,16], index: 0, kind: input, shape index: {}]
  %s1 = inlined_call_operand.hbm [shape: bf16[16,256], index: 1, kind: input, shape index: {}]
  %s2 = inlined_call_operand.hbm [shape: bf16[16,128], index: 2, kind: output, shape index: {0}]
  %s3 = inlined_call_operand.hbm [shape: f32[16,128], index: 3, kind: output, shape index: {1}]
  %4 = xla_tuple %s2, %s3
  %s5 = sld [smem:[#allocation0]]
  $region34: #{tpu_custom_call.1} parent=0
    _
  %s7 = ssub.s32 1, %s5
  %s8 = scalar_select 0, %s7, %s5
  $region1: #{tpu_custom_call.1} parent=0
    #allocation2 [shape = 'u8[4096]{0}', space=vmem, size = 0x1000, scoped, tag = 'input window, operand 0, single buffered']
    #allocation3 [shape = 's32[1]{0}', space=sflag, size = 0x4, scoped, tag = 'scoped memory for tpu_custom_call.1']
    #allocation4 [shape = 's32[1]{0}', space=sflag, size = 0x4, scoped, tag = 'scoped memory for tpu_custom_call.1']
    #allocation5 [shape = 'u8[8192]{0}', space=vmem, size = 0x2000, scoped, tag = 'input window, operand 1, single buffered']
    #allocation6 [shape = 's32[1]{0}', space=sflag, size = 0x4, scoped, tag = 'scoped memory for tpu_custom_call.1']
    #allocation7 [shape = 'u8[4096]{0}', space=vmem, size = 0x1000, scoped, tag = 'output window, operand 0, single buffered']
    #allocation8 [shape = 'u8[8192]{0}', space=vmem, size = 0x2000, scoped, tag = 'output window, operand 1, single buffered']
    #allocation9 [shape = 's32[1]{0}', space=sflag, size = 0x4, scoped, tag = 'scoped memory for tpu_custom_call.1']
    %9 = vsyncpa [#allocation3], 0
    %10 = vsyncpa [#allocation6], 0
    %11 = vsyncpa [#allocation4], 0
    %12 = vsyncpa [#allocation9], 0
    // Predicated region
    $region2: #{tpu_custom_call.1} parent=1 // pred_check
      _
    $region3: #{tpu_custom_call.1} parent=1 // pred_check_branch
      %14 = sbr.rel (0) target = $region5
    $region4: #{tpu_custom_call.1} parent=1 // pred_region
      %s16 = ssub.s32 128, 128
      %17 = vsyncadd [#allocation3], %s16
      %s18 = sshll.u32 [#allocation2], 4
      %s19 = int_to_ptr.vmem [resolvable:$true] %s18
      %24 = dma.hbm_to_vmem [thread:$0]  %s0, 128, %s19, [#allocation3], 64, 64, 4
    $region5: #{tpu_custom_call.1} parent=1 // pred_fallthru
      _
    // Predicated region
    $region6: #{tpu_custom_call.1} parent=1 // pred_check
      _
    $region7: #{tpu_custom_call.1} parent=1 // pred_check_branch
      %26 = sbr.rel (0) target = $region9
    $region8: #{tpu_custom_call.1} parent=1 // pred_region
      %s28 = ssub.s32 256, 256
      %29 = vsyncadd [#allocation6], %s28
      %s30 = sshll.u32 [#allocation5], 4
      %s31 = int_to_ptr.vmem [resolvable:$true] %s30
      %36 = dma.hbm_to_vmem [thread:$0]  %s1, 256, %s31, [#allocation6], 128, 128, 8
    $region9: #{tpu_custom_call.1} parent=1 // pred_fallthru
      _
    // Predicated region
    $region10: #{tpu_custom_call.1} parent=1 // pred_check
      _
    $region11: #{tpu_custom_call.1} parent=1 // pred_check_branch
      %38 = sbr.rel (0) target = $region13
    $region12: #{tpu_custom_call.1} parent=1 // pred_region
      %39 = dma.done [#allocation3], 128
    $region13: #{tpu_custom_call.1} parent=1 // pred_fallthru
      _
    // Predicated region
    $region14: #{tpu_custom_call.1} parent=1 // pred_check
      _
    $region15: #{tpu_custom_call.1} parent=1 // pred_check_branch
      %41 = sbr.rel (0) target = $region17
    $region16: #{tpu_custom_call.1} parent=1 // pred_region
      %42 = dma.done [#allocation6], 256
    $region17: #{tpu_custom_call.1} parent=1 // pred_fallthru
      _
    %v44 = vld [vmem:[#allocation2] sm:$0xf]
    %v45 = vld [vmem:[#allocation2 + $0x4] sm:$0xf]
    %v46 = vld [vmem:[#allocation5] sm:$0xff]
    %v47 = vld [vmem:[#allocation5 + $0x8] sm:$0xff]
    %v50 = vunpack.c.l.b16 %v44
    %v51 = vunpack.c.l.b16 %v45
    %v52 = vpack.c.b16 %v51, %v50
    %v55 = vunpack.c.l.b16 %v46
    %v56 = vunpack.c.h.b16 %v46
    %v57 = vunpack.c.l.b16 %v47
    %v58 = vunpack.c.h.b16 %v47
    %v59 = vpack.c.b16 %v57, %v55
    %v60 = vpack.c.b16 %v58, %v56
    %vm63 = vcmask 130048
    %v65 = vsel %vm63, %v52, 0
    %67 = vmatprep.subr.bf16.mxu0 0
    %68 = vmatpush1.bf16.msra.mxu0 0
    %69 = vmatprep.subr.bf16.mxu0 0
    %70 = vmatpush1.bf16.msra.mxu0 0
    %71 = vmatprep.subr.bf16.mxu0 0
    %72 = vmatpush1.bf16.msra.mxu0 0
    %73 = vmatprep.subr.bf16.mxu0 0
    %74 = vmatpush1.bf16.msra.mxu0 0
    %75 = vmatprep.subr.bf16.mxu0 0
    %76 = vmatpush1.bf16.msra.mxu0 0
    %77 = vmatprep.subr.bf16.mxu0 0
    %78 = vmatpush1.bf16.msra.mxu0 0
    %79 = vmatprep.subr.bf16.mxu0 0
    %80 = vmatpush1.bf16.msra.mxu0 0
    %81 = vmatprep.subr.bf16.mxu0 %v60
    %82 = vmatpush1.bf16.msra.mxu0 %v59
    %83 = vmatprep.subr.bf16.mxu0 0
    %84 = vmatpush2.bf16.msra.mxu0 0
    %85 = vmatprep.subr.bf16.mxu0 0
    %86 = vmatpush2.bf16.msra.mxu0 0
    %87 = vmatprep.subr.bf16.mxu0 0
    %88 = vmatpush2.bf16.msra.mxu0 0
    %89 = vmatprep.subr.bf16.mxu0 0
    %90 = vmatpush2.bf16.msra.mxu0 0
    %91 = vmatprep.subr.bf16.mxu0 0
    %92 = vmatpush2.bf16.msra.mxu0 0
    %93 = vmatprep.subr.bf16.mxu0 0
    %94 = vmatpush2.bf16.msra.mxu0 0
    %95 = vmatprep.subr.bf16.mxu0 0
    %96 = vmatpush2.bf16.msra.mxu0 0
    %97 = vmatprep.subr.bf16.mxu0 0
    %98 = vmatpush2.bf16.msra.mxu0 0
    %99 = vmatprep.mubr.bf16.mxu0 0
    %100 = vmatmul.mubr.bf16.gmra.mxu0 %v65
    %v101 = vpop.f32.mrf.mxu0
    %v102 = vadd.f32 0.0, %v101
    %v103 = vpop.f32.mrf.mxu0
    %v104 = vadd.f32 0.0, %v103
    %v105 = vpop.f32.mrf.mxu0
    %v106 = vadd.f32 0.0, %v105
    %v107 = vpop.f32.mrf.mxu0
    %v108 = vadd.f32 0.0, %v107
    %109 = vdwg.mxu0
    %v110 = vpack.c.bf16 %v106, %v102
    %v112 = vunpack.c.l.b16 %v110
    %v113 = vunpack.c.h.b16 %v110
    %v114 = vpack.c.b16 %v112, %v112
    %v115 = vpack.c.b16 %v113, %v113
    %118 = vst [vmem:[#allocation7] sm:$0xf] %v114
    %119 = vst [vmem:[#allocation7 + $0x4] sm:$0xf] %v115
    %120 = vst [vmem:[#allocation8] sm:$0xff] %v104
    %121 = vst [vmem:[#allocation8 + $0x8] sm:$0xff] %v108
    // Predicated region
    $region18: #{tpu_custom_call.1} parent=1 // pred_check
      _
    $region19: #{tpu_custom_call.1} parent=1 // pred_check_branch
      %123 = sbr.rel (0) target = $region21
    $region20: #{tpu_custom_call.1} parent=1 // pred_region
      %s125 = ssub.s32 128, 128
      %126 = vsyncadd [#allocation4], %s125
      %s127 = sshll.u32 [#allocation7], 4
      %s128 = int_to_ptr.vmem [resolvable:$true] %s127
      %133 = dma.vmem_to_hbm [thread:$0]  %s128, 128, %s2, [#allocation4], 64, 64, 4
    $region21: #{tpu_custom_call.1} parent=1 // pred_fallthru
      _
    // Predicated region
    $region22: #{tpu_custom_call.1} parent=1 // pred_check
      _
    $region23: #{tpu_custom_call.1} parent=1 // pred_check_branch
      %135 = sbr.rel (0) target = $region25
    $region24: #{tpu_custom_call.1} parent=1 // pred_region
      %s137 = ssub.s32 256, 256
      %138 = vsyncadd [#allocation9], %s137
      %s139 = sshll.u32 [#allocation8], 4
      %s140 = int_to_ptr.vmem [resolvable:$true] %s139
      %145 = dma.vmem_to_hbm [thread:$0]  %s140, 256, %s3, [#allocation9], 128, 128, 8
    $region25: #{tpu_custom_call.1} parent=1 // pred_fallthru
      _
    // Predicated region
    $region26: #{tpu_custom_call.1} parent=1 // pred_check
      _
    $region27: #{tpu_custom_call.1} parent=1 // pred_check_branch
      %147 = sbr.rel (0) target = $region29
    $region28: #{tpu_custom_call.1} parent=1 // pred_region
      %148 = dma.done [#allocation4], 128
    $region29: #{tpu_custom_call.1} parent=1 // pred_fallthru
      _
    // Predicated region
    $region30: #{tpu_custom_call.1} parent=1 // pred_check
      _
    $region31: #{tpu_custom_call.1} parent=1 // pred_check_branch
      %150 = sbr.rel (0) target = $region33
    $region32: #{tpu_custom_call.1} parent=1 // pred_region
      %151 = dma.done [#allocation9], 256
    $region33: #{tpu_custom_call.1} parent=1 // pred_fallthru
      _
    %152 = vsyncpa [#allocation3], 1
    %153 = vsyncpa [#allocation6], 1
    %154 = vsyncpa [#allocation4], 1
    %155 = vsyncpa [#allocation9], 1

</llo_original>
